<compile_context>
chip_gen: v5e
topology: v5e:2x2
jax: 0.10.0
libtpu: 0.0.40
codegen_flags: <defaults>
</compile_context>

<pallas_src>
import jax
import jax.numpy as jnp
from jax.experimental import pallas as pl
from jax.experimental.pallas import tpu as pltpu

IN_PAD = 8      # input features 5 -> 8   (sublane-aligned K of first matmul)
HID_PAD = 128   # hidden width  50 -> 128 (full lane width: dense vregs / MXU tiles)


def _round_up(n, m):
    return ((n + m - 1) // m) * m


def _pad2d(a, rows, cols):
    r, c = a.shape
    return jnp.pad(a, ((0, rows - r), (0, cols - c)))


def _mlp_kernel(x_ref, w1_ref, b1_ref, w2_ref, b2_ref, w3_ref, b3_ref, o_ref):
    """One batch tile: y = tanh(tanh(tanh(x@W1+b1)@W2+b2)@W3+b3).

    Matmuls accumulate in f32 on the MXU; the accumulator is cast to the bias
    dtype immediately, so bias-add + tanh run in bf16 on v6e/v7x (or f32 if the
    caller prepared f32 biases).  Layer 3 is only O lanes wide (unpadded).
    """
    x = x_ref[...]
    h1 = jnp.tanh(
        jnp.dot(x, w1_ref[...], preferred_element_type=jnp.float32)
        .astype(b1_ref.dtype) + b1_ref[...]
    )
    h2 = jnp.tanh(
        jnp.dot(h1.astype(w2_ref.dtype), w2_ref[...],
                preferred_element_type=jnp.float32)
        .astype(b2_ref.dtype) + b2_ref[...]
    )
    out = jnp.tanh(
        jnp.dot(h2.astype(w3_ref.dtype), w3_ref[...],
                preferred_element_type=jnp.float32)
        .astype(b3_ref.dtype) + b3_ref[...]
    )
    o_ref[...] = out.astype(o_ref.dtype)


def prepare_params(params, *, compute_dtype=jnp.bfloat16, act_dtype=None):
    """Pad + cast weights once (hoisted out of the per-call path).

    compute_dtype: weight / matmul-input dtype (bf16 halves HBM traffic, full MXU
                   rate on v6e/v7x).
    act_dtype:     bias / elementwise / tanh dtype (defaults to compute_dtype;
                   pass jnp.float32 on v5e whose VPU/EUP are f32-only).
    """
    if act_dtype is None:
        act_dtype = compute_dtype
    O = params["w3"].shape[1]
    return {
        "w1": _pad2d(params["w1"], IN_PAD, HID_PAD).astype(compute_dtype),
        "b1": _pad2d(params["b1"], 1, HID_PAD).astype(act_dtype),
        "w2": _pad2d(params["w2"], HID_PAD, HID_PAD).astype(compute_dtype),
        "b2": _pad2d(params["b2"], 1, HID_PAD).astype(act_dtype),
        # Layer 3 stays unpadded in the lane dim (O): less MXU work, less tanh,
        # and a 4x (for O=32) smaller output writeback.
        "w3": _pad2d(params["w3"], HID_PAD, O).astype(compute_dtype),
        "b3": params["b3"].astype(act_dtype),
    }


def generator_net_forward(x, prepared, *, tile_b=2048, out_dtype=jnp.float32):
    """Pallas forward pass of GeneratorNet.

    x:        (B, 5)  float32 (cast to the prepared compute dtype on the way in)
    prepared: output of prepare_params()
    returns   (B, O)  out_dtype
    """
    B = x.shape[0]
    O = prepared["w3"].shape[1]
    compute_dtype = prepared["w1"].dtype

    # Batch tile: always a multiple of 16 (bf16 sublane packing; also valid for
    # f32), capped so the grid has >= 2 steps whenever B allows it (v7x megacore).
    b_min = _round_up(max(B, 1), 16)
    want_steps = 2 if b_min >= 32 else 1
    tb_cap = _round_up(-(-b_min // want_steps), 16)
    tb = _round_up(max(16, min(tile_b, tb_cap)), 16)
    b_pad = _round_up(b_min, tb)
    grid = (b_pad // tb,)

    x_p = _pad2d(x, b_pad, IN_PAD).astype(compute_dtype)

    resident = lambda shape: pl.BlockSpec(shape, lambda i: (0, 0))
    w1, b1 = prepared["w1"], prepared["b1"]
    w2, b2 = prepared["w2"], prepared["b2"]
    w3, b3 = prepared["w3"], prepared["b3"]

    flops = 2 * b_pad * (IN_PAD * HID_PAD + HID_PAD * HID_PAD + HID_PAD * O)
    transcendentals = b_pad * (2 * HID_PAD + O)
    bytes_accessed = (
        x_p.size * x_p.dtype.itemsize
        + sum(a.size * a.dtype.itemsize for a in (w1, b1, w2, b2, w3, b3))
        + b_pad * O * jnp.dtype(out_dtype).itemsize
    )

    out = pl.pallas_call(
        _mlp_kernel,
        out_shape=jax.ShapeDtypeStruct((b_pad, O), out_dtype),
        grid=grid,
        in_specs=[
            pl.BlockSpec((tb, IN_PAD), lambda i: (i, 0)),
            resident(w1.shape), resident(b1.shape),
            resident(w2.shape), resident(b2.shape),
            resident(w3.shape), resident(b3.shape),
        ],
        # Block last dim == full array dim O, so the unpadded width is legal.
        out_specs=pl.BlockSpec((tb, O), lambda i: (i, 0)),
        compiler_params=pltpu.CompilerParams(
            # Batch grid shards across TensorCores on v7x; no-op on v5e/v6e.
            dimension_semantics=("parallel",),
            # Headroom for large tiles (v5e scoped default is only 16 MiB);
            # still below v7x's 64 MiB physical VMEM per TC.
            vmem_limit_bytes=48 * 1024 * 1024,
        ),
        cost_estimate=pl.CostEstimate(
            flops=flops,
            transcendentals=transcendentals,
            bytes_accessed=bytes_accessed,
        ),
    )(x_p, w1, b1, w2, b2, w3, b3)

    # No column slice (output is already O wide); row slice only if B was padded.
    return out if b_pad == B else out[:B]


def init_params(key, output_size):
    """Deterministic init mimicking torch.nn.Linear default (U[-1/sqrt(fan_in), +])."""
    def linear(k, fan_in, fan_out):
        kw, kb = jax.random.split(k)
        bound = 1.0 / jnp.sqrt(fan_in)
        w = jax.random.uniform(kw, (fan_in, fan_out), jnp.float32, -bound, bound)
        b = jax.random.uniform(kb, (1, fan_out), jnp.float32, -bound, bound)
        return w, b

    k1, k2, k3 = jax.random.split(key, 3)
    w1, b1 = linear(k1, 5, 50)
    w2, b2 = linear(k2, 50, 50)
    w3, b3 = linear(k3, 50, output_size)
    return {"w1": w1, "b1": b1, "w2": w2, "b2": b2, "w3": w3, "b3": b3}


def reference_forward(x, p):
    h1 = jnp.tanh(x @ p["w1"] + p["b1"])
    h2 = jnp.tanh(h1 @ p["w2"] + p["b2"])
    return jnp.tanh(h2 @ p["w3"] + p["b3"])


if __name__ == "__main__":
    key = jax.random.PRNGKey(0)
    k_x, k_p = jax.random.split(key)

    output_size = 32  # GeneratorNet(output_size=32)
    params = init_params(k_p, output_size)

    # Pad/cast once (hoisted out of the per-call path).
    params_f32 = prepare_params(params, compute_dtype=jnp.float32)
    params_bf16 = prepare_params(params, compute_dtype=jnp.bfloat16)

    # 1) Small batch, exact f32 compute path vs. f32 reference (tight tolerance).
    x_small = jax.random.normal(k_x, (8, 5), jnp.float32)
    out_f32 = jax.block_until_ready(generator_net_forward(x_small, params_f32))
    ref = reference_forward(x_small, params)
    assert out_f32.shape == (8, output_size)
    assert jnp.allclose(out_f32, ref, atol=1e-4, rtol=1e-4), "f32 Pallas output mismatch"

    # 2) bf16 fast path (bf16 weights/activations/output => halved HBM traffic,
    #    full-rate MXU on v6e/v7x); looser tolerance for the bf16 casts.
    out_bf16 = jax.block_until_ready(
        generator_net_forward(x_small, params_bf16, out_dtype=jnp.bfloat16))
    assert out_bf16.shape == (8, output_size)
    assert jnp.allclose(out_bf16.astype(jnp.float32), ref, atol=5e-2, rtol=5e-2), \
        "bf16 Pallas output mismatch"

    # 3) Exercise the batch grid + row padding (B not a multiple of the tile,
    #    multi-step grid -> both v7x cores busy, pipelined in/out DMAs).
    x_big = jax.random.normal(k_x, (200, 5), jnp.float32)
    out_big = jax.block_until_ready(
        generator_net_forward(x_big, params_f32, tile_b=64))
    ref_big = reference_forward(x_big, params)
    assert out_big.shape == (200, output_size)
    assert jnp.allclose(out_big, ref_big, atol=1e-4, rtol=1e-4), "tiled Pallas output mismatch"

    print("KERNEL_OK")
</pallas_src>

<mosaic_0001>
module attributes {stable_mosaic.version = 11 : i64} {
  func.func @_mlp_kernel(%arg0: i32, %arg1: memref<16x8xf32, #tpu.memory_space<vmem>>, %arg2: memref<8x128xf32, #tpu.memory_space<vmem>>, %arg3: memref<1x128xf32, #tpu.memory_space<vmem>>, %arg4: memref<128x128xf32, #tpu.memory_space<vmem>>, %arg5: memref<1x128xf32, #tpu.memory_space<vmem>>, %arg6: memref<128x32xf32, #tpu.memory_space<vmem>>, %arg7: memref<1x32xf32, #tpu.memory_space<vmem>>, %arg8: memref<16x32xf32, #tpu.memory_space<vmem>>) attributes {dimension_semantics = [#tpu.dimension_semantics<parallel>], iteration_bounds = array<i64: 1>, scalar_prefetch = 0 : i64, scratch_operands = 0 : i64, tpu.core_type = #tpu.core_type<tc>, window_params = [{transform_indices = @transform_0, window_bounds = array<i64: 16, 8>}, {pipeline_mode = #tpu.pipeline_mode<synchronous>, transform_indices = @transform_1, window_bounds = array<i64: 8, 128>}, {pipeline_mode = #tpu.pipeline_mode<synchronous>, transform_indices = @transform_2, window_bounds = array<i64: 1, 128>}, {pipeline_mode = #tpu.pipeline_mode<synchronous>, transform_indices = @transform_3, window_bounds = array<i64: 128, 128>}, {pipeline_mode = #tpu.pipeline_mode<synchronous>, transform_indices = @transform_4, window_bounds = array<i64: 1, 128>}, {pipeline_mode = #tpu.pipeline_mode<synchronous>, transform_indices = @transform_5, window_bounds = array<i64: 128, 32>}, {pipeline_mode = #tpu.pipeline_mode<synchronous>, transform_indices = @transform_6, window_bounds = array<i64: 1, 32>}, {transform_indices = @transform_7, window_bounds = array<i64: 16, 32>}]} {
    %c0 = arith.constant 0 : index
    %c0_0 = arith.constant 0 : index
    %0 = vector.load %arg1[%c0, %c0_0] : memref<16x8xf32, #tpu.memory_space<vmem>>, vector<16x8xf32>
    %c0_1 = arith.constant 0 : index
    %c0_2 = arith.constant 0 : index
    %1 = vector.load %arg2[%c0_1, %c0_2] : memref<8x128xf32, #tpu.memory_space<vmem>>, vector<8x128xf32>
    %cst = arith.constant dense<0.000000e+00> : vector<16x128xf32>
    %2 = tpu.matmul %0, %1, %cst {dimension_numbers = #tpu.dot_dimension_numbers<[1], [0], [0], [1], [0, 0, 1, 1], [], []>} : vector<16x8xf32>, vector<8x128xf32>, vector<16x128xf32> -> vector<16x128xf32>
    %c0_3 = arith.constant 0 : index
    %c0_4 = arith.constant 0 : index
    %3 = vector.load %arg3[%c0_3, %c0_4] : memref<1x128xf32, #tpu.memory_space<vmem>>, vector<1x128xf32>
    %4 = vector.broadcast %3 : vector<1x128xf32> to vector<16x128xf32>
    %5 = arith.addf %2, %4 : vector<16x128xf32>
    %6 = math.tanh %5 : vector<16x128xf32>
    %c0_5 = arith.constant 0 : index
    %c0_6 = arith.constant 0 : index
    %7 = vector.load %arg4[%c0_5, %c0_6] : memref<128x128xf32, #tpu.memory_space<vmem>>, vector<128x128xf32>
    %cst_7 = arith.constant dense<0.000000e+00> : vector<16x128xf32>
    %8 = tpu.matmul %6, %7, %cst_7 {dimension_numbers = #tpu.dot_dimension_numbers<[1], [0], [0], [1], [0, 0, 1, 1], [], []>} : vector<16x128xf32>, vector<128x128xf32>, vector<16x128xf32> -> vector<16x128xf32>
    %c0_8 = arith.constant 0 : index
    %c0_9 = arith.constant 0 : index
    %9 = vector.load %arg5[%c0_8, %c0_9] : memref<1x128xf32, #tpu.memory_space<vmem>>, vector<1x128xf32>
    %10 = vector.broadcast %9 : vector<1x128xf32> to vector<16x128xf32>
    %11 = arith.addf %8, %10 : vector<16x128xf32>
    %12 = math.tanh %11 : vector<16x128xf32>
    %c0_10 = arith.constant 0 : index
    %c0_11 = arith.constant 0 : index
    %13 = vector.load %arg6[%c0_10, %c0_11] : memref<128x32xf32, #tpu.memory_space<vmem>>, vector<128x32xf32>
    %cst_12 = arith.constant dense<0.000000e+00> : vector<16x32xf32>
    %14 = tpu.matmul %12, %13, %cst_12 {dimension_numbers = #tpu.dot_dimension_numbers<[1], [0], [0], [1], [0, 0, 1, 1], [], []>} : vector<16x128xf32>, vector<128x32xf32>, vector<16x32xf32> -> vector<16x32xf32>
    %c0_13 = arith.constant 0 : index
    %c0_14 = arith.constant 0 : index
    %15 = vector.load %arg7[%c0_13, %c0_14] : memref<1x32xf32, #tpu.memory_space<vmem>>, vector<1x32xf32>
    %16 = vector.broadcast %15 : vector<1x32xf32> to vector<16x32xf32>
    %17 = arith.addf %14, %16 : vector<16x32xf32>
    %18 = math.tanh %17 : vector<16x32xf32>
    %c0_15 = arith.constant 0 : index
    %c0_16 = arith.constant 0 : index
    %19 = vector.load %arg8[%c0_15, %c0_16] : memref<16x32xf32, #tpu.memory_space<vmem>>, vector<16x32xf32>
    tpu.vector_store %arg8[%c0_15, %c0_16], %18 {strides = array<i32>} : memref<16x32xf32, #tpu.memory_space<vmem>>, vector<16x32xf32>,
    return
  }
  func.func @transform_0(%arg0: i32) -> (i32, i32) {
    %c0_i32 = arith.constant 0 : i32
    %c0_i32_0 = arith.constant 0 : i32
    return %arg0, %c0_i32 : i32, i32
  }
  func.func @transform_1(%arg0: i32) -> (i32, i32) {
    %c0_i32 = arith.constant 0 : i32
    %c0_i32_0 = arith.constant 0 : i32
    %c0_i32_1 = arith.constant 0 : i32
    return %c0_i32, %c0_i32_0 : i32, i32
  }
  func.func @transform_2(%arg0: i32) -> (i32, i32) {
    %c0_i32 = arith.constant 0 : i32
    %c0_i32_0 = arith.constant 0 : i32
    %c0_i32_1 = arith.constant 0 : i32
    return %c0_i32, %c0_i32_0 : i32, i32
  }
  func.func @transform_3(%arg0: i32) -> (i32, i32) {
    %c0_i32 = arith.constant 0 : i32
    %c0_i32_0 = arith.constant 0 : i32
    %c0_i32_1 = arith.constant 0 : i32
    return %c0_i32, %c0_i32_0 : i32, i32
  }
  func.func @transform_4(%arg0: i32) -> (i32, i32) {
    %c0_i32 = arith.constant 0 : i32
    %c0_i32_0 = arith.constant 0 : i32
    %c0_i32_1 = arith.constant 0 : i32
    return %c0_i32, %c0_i32_0 : i32, i32
  }
  func.func @transform_5(%arg0: i32) -> (i32, i32) {
    %c0_i32 = arith.constant 0 : i32
    %c0_i32_0 = arith.constant 0 : i32
    %c0_i32_1 = arith.constant 0 : i32
    return %c0_i32, %c0_i32_0 : i32, i32
  }
  func.func @transform_6(%arg0: i32) -> (i32, i32) {
    %c0_i32 = arith.constant 0 : i32
    %c0_i32_0 = arith.constant 0 : i32
    %c0_i32_1 = arith.constant 0 : i32
    return %c0_i32, %c0_i32_0 : i32, i32
  }
  func.func @transform_7(%arg0: i32) -> (i32, i32) {
    %c0_i32 = arith.constant 0 : i32
    %c0_i32_0 = arith.constant 0 : i32
    return %arg0, %c0_i32 : i32, i32
  }
}

</mosaic_0001>

<llo_original>
// kernel: tpu_custom_call.1
$region0: #{tpu_custom_call.1}
  #allocation0 [shape = 'u32[]', space=smem, size = 0x4, offset = 0x4, fixed_abs, tag = 'smem constant byte address 0x4 - core index']
  #allocation1 [shape = 'u32[72,128]{1,0:T(1,128)}', space=vmem, size = 0x9000, scoped, tag = 'internal scratch']
  %s0 = inlined_call_operand.vmem [shape: f32[16,8], index: 0, kind: input, shape index: {}]
  %s1 = inlined_call_operand.vmem [shape: f32[8,128], index: 1, kind: input, shape index: {}]
  %s2 = inlined_call_operand.vmem [shape: f32[1,128], index: 2, kind: input, shape index: {}]
  %s3 = inlined_call_operand.vmem [shape: f32[128,128], index: 3, kind: input, shape index: {}]
  %s4 = inlined_call_operand.vmem [shape: f32[1,128], index: 4, kind: input, shape index: {}]
  %s5 = inlined_call_operand.vmem [shape: f32[128,32], index: 5, kind: input, shape index: {}]
  %s6 = inlined_call_operand.vmem [shape: f32[1,32], index: 6, kind: input, shape index: {}]
  %s7 = inlined_call_operand.hbm [shape: f32[16,32], index: 7, kind: output, shape index: {}]
  %s8 = sld [smem:[#allocation0]]
  $region38: #{tpu_custom_call.1} parent=0
    _
  %s10 = ssub.s32 1, %s8
  %s11 = scalar_select 0, %s10, %s8
  $region1: #{tpu_custom_call.1} parent=0
    #allocation2 [shape = 'u8[8192]{0}', space=vmem, size = 0x2000, scoped, tag = 'output window, operand 0, single buffered']
    #allocation3 [shape = 's32[1]{0}', space=sflag, size = 0x4, scoped, tag = 'scoped memory for tpu_custom_call.1']
    %12 = vsyncpa [#allocation3], 0
    // Predicated region
    $region2: #{tpu_custom_call.1} parent=1 // pred_check
      _
    $region3: #{tpu_custom_call.1} parent=1 // pred_check_branch
      %14 = sbr.rel (0) target = $region5
    $region4: #{tpu_custom_call.1} parent=1 // pred_region
      _
    $region5: #{tpu_custom_call.1} parent=1 // pred_fallthru
      _
    // Predicated region
    $region6: #{tpu_custom_call.1} parent=1 // pred_check
      _
    $region7: #{tpu_custom_call.1} parent=1 // pred_check_branch
      %16 = sbr.rel (0) target = $region9
    $region8: #{tpu_custom_call.1} parent=1 // pred_region
      _
    $region9: #{tpu_custom_call.1} parent=1 // pred_fallthru
      _
    // Predicated region
    $region10: #{tpu_custom_call.1} parent=1 // pred_check
      _
    $region11: #{tpu_custom_call.1} parent=1 // pred_check_branch
      %18 = sbr.rel (0) target = $region13
    $region12: #{tpu_custom_call.1} parent=1 // pred_region
      _
    $region13: #{tpu_custom_call.1} parent=1 // pred_fallthru
      _
    // Predicated region
    $region14: #{tpu_custom_call.1} parent=1 // pred_check
      _
    $region15: #{tpu_custom_call.1} parent=1 // pred_check_branch
      %20 = sbr.rel (0) target = $region17
    $region16: #{tpu_custom_call.1} parent=1 // pred_region
      _
    $region17: #{tpu_custom_call.1} parent=1 // pred_fallthru
      _
    // Predicated region
    $region18: #{tpu_custom_call.1} parent=1 // pred_check
      _
    $region19: #{tpu_custom_call.1} parent=1 // pred_check_branch
      %22 = sbr.rel (0) target = $region21
    $region20: #{tpu_custom_call.1} parent=1 // pred_region
      _
    $region21: #{tpu_custom_call.1} parent=1 // pred_fallthru
      _
    // Predicated region
    $region22: #{tpu_custom_call.1} parent=1 // pred_check
      _
    $region23: #{tpu_custom_call.1} parent=1 // pred_check_branch
      %24 = sbr.rel (0) target = $region25
    $region24: #{tpu_custom_call.1} parent=1 // pred_region
      _
    $region25: #{tpu_custom_call.1} parent=1 // pred_fallthru
      _
    // Predicated region
    $region26: #{tpu_custom_call.1} parent=1 // pred_check
      _
    $region27: #{tpu_custom_call.1} parent=1 // pred_check_branch
      %26 = sbr.rel (0) target = $region29
    $region28: #{tpu_custom_call.1} parent=1 // pred_region
      _
    $region29: #{tpu_custom_call.1} parent=1 // pred_fallthru
      _
    %v27 = vld [vmem:[%s0] sm:$0xff]
    %v28 = vld [vmem:[%s0 + $0x8] sm:$0xff]
    %v29 = vld [vmem:[%s1] sm:$0xff]
    %v30 = vld [vmem:[%s2] sm:$0x1]
    %v32 = vperm.slane %v30, 0
    %vm34 = vcmask 64512
    %v36 = vsel %vm34, %v27, 0
    %v39 = vsel %vm34, %v28, 0
    %41 = vmatpush.msra.mxu0 0.0
    %42 = vmatpush.msra.mxu0 0.0
    %43 = vmatpush.msra.mxu0 0.0
    %44 = vmatpush.msra.mxu0 0.0
    %45 = vmatpush.msra.mxu0 0.0
    %46 = vmatpush.msra.mxu0 0.0
    %47 = vmatpush.msra.mxu0 0.0
    %48 = vmatpush.msra.mxu0 0.0
    %49 = vmatpush.msra.mxu0 0.0
    %50 = vmatpush.msra.mxu0 0.0
    %51 = vmatpush.msra.mxu0 0.0
    %52 = vmatpush.msra.mxu0 0.0
    %53 = vmatpush.msra.mxu0 0.0
    %54 = vmatpush.msra.mxu0 0.0
    %55 = vmatpush.msra.mxu0 0.0
    %56 = vmatpush.msra.mxu0 %v29
    %57 = vmatmul.f32.gmra.mxu0 %v36
    %v58 = vpop.f32.mrf.mxu0
    %v59 = vadd.f32 %v32, %v58
    %60 = vmatmul.f32.gmra.mxu0 %v39
    %v61 = vpop.f32.mrf.mxu0
    %v62 = vadd.f32 %v32, %v61
    %63 = vdwg.mxu0
    %v64 = vtanh.pop %v59
    %v65 = vtanh.pop %v62
    %v66 = vld [vmem:[%s3] sm:$0xff]
    %v67 = vld [vmem:[%s3 + $0x8] sm:$0xff]
    %v68 = vld [vmem:[%s3 + $0x10] sm:$0xff]
    %v69 = vld [vmem:[%s3 + $0x18] sm:$0xff]
    %v70 = vld [vmem:[%s3 + $0x20] sm:$0xff]
    %v71 = vld [vmem:[%s3 + $0x28] sm:$0xff]
    %v72 = vld [vmem:[%s3 + $0x30] sm:$0xff]
    %v73 = vld [vmem:[%s3 + $0x38] sm:$0xff]
    %v74 = vld [vmem:[%s3 + $0x40] sm:$0xff]
    %v75 = vld [vmem:[%s3 + $0x48] sm:$0xff]
    %v76 = vld [vmem:[%s3 + $0x50] sm:$0xff]
    %v77 = vld [vmem:[%s3 + $0x58] sm:$0xff]
    %v78 = vld [vmem:[%s3 + $0x60] sm:$0xff]
    %v79 = vld [vmem:[%s3 + $0x68] sm:$0xff]
    %v80 = vld [vmem:[%s3 + $0x70] sm:$0xff]
    %v81 = vld [vmem:[%s3 + $0x78] sm:$0xff]
    %v82 = vld [vmem:[%s4] sm:$0x1]
    %v84 = vperm.slane %v82, 0
    %86 = vmatpush.msra.mxu0 %v81
    %87 = vmatpush.msra.mxu0 %v80
    %88 = vmatpush.msra.mxu0 %v79
    %89 = vmatpush.msra.mxu0 %v78
    %90 = vmatpush.msra.mxu0 %v77
    %91 = vmatpush.msra.mxu0 %v76
    %92 = vmatpush.msra.mxu0 %v75
    %93 = vmatpush.msra.mxu0 %v74
    %94 = vmatpush.msra.mxu0 %v73
    %95 = vmatpush.msra.mxu0 %v72
    %96 = vmatpush.msra.mxu0 %v71
    %97 = vmatpush.msra.mxu0 %v70
    %98 = vmatpush.msra.mxu0 %v69
    %99 = vmatpush.msra.mxu0 %v68
    %100 = vmatpush.msra.mxu0 %v67
    %101 = vmatpush.msra.mxu0 %v66
    %102 = vmatmul.f32.gmra.mxu0 %v64
    %v103 = vpop.f32.mrf.mxu0
    %v104 = vadd.f32 %v84, %v103
    %105 = vmatmul.f32.gmra.mxu0 %v65
    %v106 = vpop.f32.mrf.mxu0
    %v107 = vadd.f32 %v84, %v106
    %108 = vdwg.mxu0
    %v109 = vtanh.pop %v104
    %v110 = vtanh.pop %v107
    %v111 = vld [vmem:[%s5] sm:$0xff]
    %v112 = vld [vmem:[%s5 + $0x8] sm:$0xff]
    %v113 = vld [vmem:[%s5 + $0x10] sm:$0xff]
    %v114 = vld [vmem:[%s5 + $0x18] sm:$0xff]
    %v115 = vld [vmem:[%s5 + $0x20] sm:$0xff]
    %v116 = vld [vmem:[%s5 + $0x28] sm:$0xff]
    %v117 = vld [vmem:[%s5 + $0x30] sm:$0xff]
    %v118 = vld [vmem:[%s5 + $0x38] sm:$0xff]
    %v119 = vld [vmem:[%s5 + $0x40] sm:$0xff]
    %v120 = vld [vmem:[%s5 + $0x48] sm:$0xff]
    %v121 = vld [vmem:[%s5 + $0x50] sm:$0xff]
    %v122 = vld [vmem:[%s5 + $0x58] sm:$0xff]
    %v123 = vld [vmem:[%s5 + $0x60] sm:$0xff]
    %v124 = vld [vmem:[%s5 + $0x68] sm:$0xff]
    %v125 = vld [vmem:[%s5 + $0x70] sm:$0xff]
    %v126 = vld [vmem:[%s5 + $0x78] sm:$0xff]
    %v127 = vld [vmem:[%s6] sm:$0x1]
    %v129 = vperm.slane %v127, 0
    %131 = vmatpush.msra.mxu0 %v126
    %132 = vmatpush.msra.mxu0 %v125
    %133 = vmatpush.msra.mxu0 %v124
    %134 = vmatpush.msra.mxu0 %v123
    %135 = vmatpush.msra.mxu0 %v122
    %136 = vmatpush.msra.mxu0 %v121
    %137 = vmatpush.msra.mxu0 %v120
    %138 = vmatpush.msra.mxu0 %v119
    %139 = vmatpush.msra.mxu0 %v118
    %140 = vmatpush.msra.mxu0 %v117
    %141 = vmatpush.msra.mxu0 %v116
    %142 = vmatpush.msra.mxu0 %v115
    %143 = vmatpush.msra.mxu0 %v114
    %144 = vmatpush.msra.mxu0 %v113
    %145 = vmatpush.msra.mxu0 %v112
    %146 = vmatpush.msra.mxu0 %v111
    %147 = vmatmul.f32.gmra.mxu0 %v109
    %v148 = vpop.f32.mrf.mxu0
    %v149 = vadd.f32 %v129, %v148
    %150 = vmatmul.f32.gmra.mxu0 %v110
    %v151 = vpop.f32.mrf.mxu0
    %v152 = vadd.f32 %v129, %v151
    %153 = vdwg.mxu0
    %v154 = vtanh.pop %v149
    %v155 = vtanh.pop %v152
    %vm156 = vcmask 261120
    %157 = vst.msk [vmem:[#allocation2] sm:$0xff] %vm156, %v154
    %158 = vst.msk [vmem:[#allocation2 + $0x8] sm:$0xff] %vm156, %v155
    // Predicated region
    $region30: #{tpu_custom_call.1} parent=1 // pred_check
      _
    $region31: #{tpu_custom_call.1} parent=1 // pred_check_branch
      %160 = sbr.rel (0) target = $region33
    $region32: #{tpu_custom_call.1} parent=1 // pred_region
      %162 = vsyncadd [#allocation3], 0
      %s163 = sshll.u32 [#allocation2], 4
      %s164 = int_to_ptr.vmem [resolvable:$true] %s163
      %s165 = sshll.u32 %s7, 4
      %s166 = int_to_ptr.hbm [resolvable:$true] %s165
      %171 = dma.vmem_to_hbm [thread:$0]  %s164, 256, %s166, [#allocation3], 128, 128, 8
    $region33: #{tpu_custom_call.1} parent=1 // pred_fallthru
      _
    // Predicated region
    $region34: #{tpu_custom_call.1} parent=1 // pred_check
      _
    $region35: #{tpu_custom_call.1} parent=1 // pred_check_branch
      %173 = sbr.rel (0) target = $region37
    $region36: #{tpu_custom_call.1} parent=1 // pred_region
      %175 = dma.done [#allocation3], 256
    $region37: #{tpu_custom_call.1} parent=1 // pred_fallthru
      _
    %176 = vsyncpa [#allocation3], 1

</llo_original>
